<compile_context>
chip_gen: v7x
topology: tpu7x:2x2x1
jax: 0.10.0
libtpu: 0.0.40
codegen_flags: <defaults>
</compile_context>

<pallas_src>
import jax
import jax.numpy as jnp
from jax.experimental import pallas as pl
from jax.experimental.pallas import tpu as pltpu


_TARGET_TILE_BYTES = 1 << 20  # aim for ~1 MiB input tiles per grid step


def _num_tensorcores_per_chip() -> int:
    """Best-effort TensorCores-per-chip ('parallel' grid axes shard over these)."""
    try:
        kind = jax.devices()[0].device_kind.lower()
    except Exception:  # pragma: no cover - conservative fallback
        return 2
    # v5e / v6e expose a single TensorCore per chip; v7x exposes two.
    for single_tc in ("v5 lite", "v5e", "v6 lite", "v6e"):
        if single_tc in kind:
            return 1
    return 2


def _default_batch_block(B: int, C: int, HW: int, itemsize: int) -> int:
    """Pick TB: big enough to amortize per-grid-step overhead, small enough to
    keep >= num_tensorcores grid steps, and a divisor of B."""
    bytes_per_row = max(C * HW * itemsize, 1)
    target_rows = max(1, _TARGET_TILE_BYTES // bytes_per_row)
    min_steps = max(1, min(B, _num_tensorcores_per_chip()))
    max_rows = max(1, B // min_steps)
    tb = max(1, min(target_rows, max_rows, B))
    while B % tb:  # round down to a divisor of B so every block is full
        tb -= 1
    return tb


def se_block_kernel(x_ref, w1_ref, w2_ref, o_ref):
    # x_ref, o_ref: (TB, C, HW); w1_ref: (C_red, C); w2_ref: (C, C_red)

    # Load the tile once and keep it live: at these tile sizes it is only a
    # few vregs, so re-reading from VMEM would just duplicate vld traffic.
    x = x_ref[...]

    # --- squeeze: global average pool over the lane (HW) axis, in f32 ---
    se = jnp.mean(x.astype(jnp.float32), axis=-1)                      # (TB, C)

    # --- excite: tiny FCs on the VPU (shapes are far below one MXU tile) ---
    # fc1 (no bias) + ReLU:   h[b, j] = sum_c se[b, c] * W1[j, c]
    h = jnp.sum(se[:, None, :] * w1_ref[...][None, :, :], axis=-1)     # (TB, C_red)
    h = jnp.maximum(h, 0.0)
    # fc2 (no bias) + sigmoid: s[b, c] = sum_j h[b, j] * W2[c, j]
    s = jnp.sum(h[:, None, :] * w2_ref[...][None, :, :], axis=-1)      # (TB, C)
    s = jax.nn.sigmoid(s)                                              # f32 gate

    # --- scale: gate computed in f32, multiply in the activation dtype so
    #     bf16 inputs stay bf16 on the dominant elementwise pass ---
    o_ref[...] = x * s.astype(x.dtype)[:, :, None]


def se_block(x_nchw, fc1_weight, fc2_weight, *, batch_block=None):
    """SEBlock forward.

    x_nchw:      (B, C, H, W)   activations
    fc1_weight:  (C//r, C)      PyTorch nn.Linear convention (out, in)
    fc2_weight:  (C, C//r)
    batch_block: rows of the batch per grid step (default: auto heuristic).
    """
    B, C, H, W = x_nchw.shape
    HW = H * W
    C_red = fc1_weight.shape[0]
    itemsize = jnp.dtype(x_nchw.dtype).itemsize

    if batch_block is None:
        batch_block = _default_batch_block(B, C, HW, itemsize)
    if B % batch_block:
        raise ValueError(f"batch_block={batch_block} must divide B={B}")
    TB = batch_block
    grid = (B // TB,)

    x_flat = x_nchw.reshape(B, C, HW)

    # Advisory cost hint: this kernel is HBM-bandwidth / overhead dominated.
    w_bytes = (fc1_weight.size * jnp.dtype(fc1_weight.dtype).itemsize
               + fc2_weight.size * jnp.dtype(fc2_weight.dtype).itemsize)
    cost = pl.CostEstimate(
        flops=2 * B * C * HW + 4 * B * C * C_red,        # mean + scale + two tiny FCs
        transcendentals=B * C,                           # sigmoid
        bytes_accessed=2 * B * C * HW * itemsize + w_bytes,
    )

    out_flat = pl.pallas_call(
        se_block_kernel,
        out_shape=jax.ShapeDtypeStruct((B, C, HW), x_nchw.dtype),
        grid=grid,
        in_specs=[
            pl.BlockSpec((TB, C, HW), lambda b: (b, 0, 0)),   # pipelined batch tile
            pl.BlockSpec((C_red, C), lambda b: (0, 0)),       # resident (tiny) weights
            pl.BlockSpec((C, C_red), lambda b: (0, 0)),
        ],
        out_specs=pl.BlockSpec((TB, C, HW), lambda b: (b, 0, 0)),
        compiler_params=pltpu.CompilerParams(
            dimension_semantics=("parallel",),                # v7x: shard batch over both TCs
        ),
        cost_estimate=cost,
    )(x_flat, fc1_weight, fc2_weight)

    return out_flat.reshape(B, C, H, W)


def se_block_reference(x_nchw, fc1_weight, fc2_weight):
    """Pure-JAX reference mirroring the PyTorch forward."""
    se = jnp.mean(x_nchw, axis=(2, 3))            # global_avg_pool + view(b, c)
    se = jnp.maximum(se @ fc1_weight.T, 0.0)      # relu(fc1(se))
    se = jax.nn.sigmoid(se @ fc2_weight.T)        # sigmoid(fc2(se))
    return x_nchw * se[:, :, None, None]


if __name__ == "__main__":
    key = jax.random.PRNGKey(0)
    k_x, k_w1, k_w2 = jax.random.split(key, 3)

    B, C, H, W = 2, 32, 16, 16
    reduction = 16
    C_red = C // reduction  # 2

    x = jax.random.normal(k_x, (B, C, H, W), dtype=jnp.float32)
    # Deterministic synthetic weights (nn.Linear shapes: (out_features, in_features)).
    fc1_w = jax.random.normal(k_w1, (C_red, C), dtype=jnp.float32) * (1.0 / jnp.sqrt(C))
    fc2_w = jax.random.normal(k_w2, (C, C_red), dtype=jnp.float32) * (1.0 / jnp.sqrt(C_red))

    out = se_block(x, fc1_w, fc2_w)
    out = jax.block_until_ready(out)

    ref = se_block_reference(x, fc1_w, fc2_w)

    assert out.shape == (B, C, H, W)
    assert jnp.allclose(out, ref, atol=1e-5, rtol=1e-5), "mismatch vs reference"

    print("KERNEL_OK")
</pallas_src>

<mosaic_0001>
module attributes {stable_mosaic.version = 11 : i64} {
  func.func @se_block_kernel(%arg0: i32, %arg1: memref<1x32x256xf32, #tpu.memory_space<vmem>>, %arg2: memref<2x32xf32, #tpu.memory_space<vmem>>, %arg3: memref<32x2xf32, #tpu.memory_space<vmem>>, %arg4: memref<1x32x256xf32, #tpu.memory_space<vmem>>) attributes {dimension_semantics = [#tpu.dimension_semantics<parallel>], iteration_bounds = array<i64: 2>, scalar_prefetch = 0 : i64, scratch_operands = 0 : i64, tpu.core_type = #tpu.core_type<tc>, window_params = [{transform_indices = @transform_0, window_bounds = array<i64: 1, 32, 256>}, {pipeline_mode = #tpu.pipeline_mode<synchronous>, transform_indices = @transform_1, window_bounds = array<i64: 2, 32>}, {pipeline_mode = #tpu.pipeline_mode<synchronous>, transform_indices = @transform_2, window_bounds = array<i64: 32, 2>}, {transform_indices = @transform_3, window_bounds = array<i64: 1, 32, 256>}]} {
    %c0 = arith.constant 0 : index
    %c0_0 = arith.constant 0 : index
    %c0_1 = arith.constant 0 : index
    %0 = vector.load %arg1[%c0, %c0_0, %c0_1] : memref<1x32x256xf32, #tpu.memory_space<vmem>>, vector<1x32x256xf32>
    %cst = arith.constant dense<0.000000e+00> : vector<1x32xf32>
    %1 = vector.multi_reduction <add>, %0, %cst [2] : vector<1x32x256xf32> to vector<1x32xf32>
    %cst_2 = arith.constant 2.560000e+02 : f32
    %2 = vector.broadcast %cst_2 : f32 to vector<1x32xf32>
    %3 = arith.divf %1, %2 : vector<1x32xf32>
    %4 = vector.shape_cast %3 : vector<1x32xf32> to vector<1x1x32xf32>
    %c0_3 = arith.constant 0 : index
    %c0_4 = arith.constant 0 : index
    %5 = vector.load %arg2[%c0_3, %c0_4] : memref<2x32xf32, #tpu.memory_space<vmem>>, vector<2x32xf32>
    %6 = vector.shape_cast %5 : vector<2x32xf32> to vector<1x2x32xf32>
    %7 = vector.broadcast %4 : vector<1x1x32xf32> to vector<1x2x32xf32>
    %8 = arith.mulf %7, %6 : vector<1x2x32xf32>
    %cst_5 = arith.constant dense<0.000000e+00> : vector<1x2xf32>
    %9 = vector.multi_reduction <add>, %8, %cst_5 [2] : vector<1x2x32xf32> to vector<1x2xf32>
    %cst_6 = arith.constant 0.000000e+00 : f32
    %10 = vector.broadcast %cst_6 : f32 to vector<1x2xf32>
    %11 = arith.maximumf %9, %10 : vector<1x2xf32>
    %12 = vector.shape_cast %11 : vector<1x2xf32> to vector<1x1x2xf32>
    %c0_7 = arith.constant 0 : index
    %c0_8 = arith.constant 0 : index
    %13 = vector.load %arg3[%c0_7, %c0_8] : memref<32x2xf32, #tpu.memory_space<vmem>>, vector<32x2xf32>
    %14 = vector.shape_cast %13 : vector<32x2xf32> to vector<1x32x2xf32>
    %15 = vector.broadcast %12 : vector<1x1x2xf32> to vector<1x32x2xf32>
    %16 = arith.mulf %15, %14 : vector<1x32x2xf32>
    %cst_9 = arith.constant dense<0.000000e+00> : vector<1x32xf32>
    %17 = vector.multi_reduction <add>, %16, %cst_9 [2] : vector<1x32x2xf32> to vector<1x32xf32>
    %18 = arith.negf %17 : vector<1x32xf32>
    %19 = math.exp %18 : vector<1x32xf32>
    %cst_10 = arith.constant 1.000000e+00 : f32
    %20 = vector.broadcast %cst_10 : f32 to vector<1x32xf32>
    %21 = arith.addf %20, %19 : vector<1x32xf32>
    %22 = arith.divf %20, %21 : vector<1x32xf32>
    %23 = vector.shape_cast %22 : vector<1x32xf32> to vector<1x32x1xf32>
    %24 = vector.broadcast %23 : vector<1x32x1xf32> to vector<1x32x256xf32>
    %25 = arith.mulf %0, %24 : vector<1x32x256xf32>
    %c0_11 = arith.constant 0 : index
    %c0_12 = arith.constant 0 : index
    %c0_13 = arith.constant 0 : index
    %26 = vector.load %arg4[%c0_11, %c0_12, %c0_13] : memref<1x32x256xf32, #tpu.memory_space<vmem>>, vector<1x32x256xf32>
    tpu.vector_store %arg4[%c0_11, %c0_12, %c0_13], %25 {strides = array<i32>} : memref<1x32x256xf32, #tpu.memory_space<vmem>>, vector<1x32x256xf32>,
    return
  }
  func.func @transform_0(%arg0: i32) -> (i32, i32, i32) {
    %c0_i32 = arith.constant 0 : i32
    %c0_i32_0 = arith.constant 0 : i32
    %c0_i32_1 = arith.constant 0 : i32
    return %arg0, %c0_i32, %c0_i32_0 : i32, i32, i32
  }
  func.func @transform_1(%arg0: i32) -> (i32, i32) {
    %c0_i32 = arith.constant 0 : i32
    %c0_i32_0 = arith.constant 0 : i32
    %c0_i32_1 = arith.constant 0 : i32
    return %c0_i32, %c0_i32_0 : i32, i32
  }
  func.func @transform_2(%arg0: i32) -> (i32, i32) {
    %c0_i32 = arith.constant 0 : i32
    %c0_i32_0 = arith.constant 0 : i32
    %c0_i32_1 = arith.constant 0 : i32
    return %c0_i32, %c0_i32_0 : i32, i32
  }
  func.func @transform_3(%arg0: i32) -> (i32, i32, i32) {
    %c0_i32 = arith.constant 0 : i32
    %c0_i32_0 = arith.constant 0 : i32
    %c0_i32_1 = arith.constant 0 : i32
    return %arg0, %c0_i32, %c0_i32_0 : i32, i32, i32
  }
}

</mosaic_0001>

<llo_original>
// kernel: tpu_custom_call.1
$region0: #{tpu_custom_call.1}
  #allocation0 [shape = 'u32[]', space=smem, size = 0x4, offset = 0x4, fixed_abs, tag = 'smem constant byte address 0x4 - core index']
  #allocation1 [shape = 'u32[144,128]{1,0:T(1,128)}', space=vmem, size = 0x12000, scoped, tag = 'internal scratch']
  %s0 = inlined_call_operand.hbm [shape: f32[2,32,256], index: 0, kind: input, shape index: {}]
  %s1 = inlined_call_operand.vmem [shape: f32[2,32], index: 1, kind: input, shape index: {}]
  %s2 = inlined_call_operand.vmem [shape: f32[32,2], index: 2, kind: input, shape index: {}]
  %s3 = inlined_call_operand.hbm [shape: f32[2,32,256], index: 3, kind: output, shape index: {}]
  %s4 = sld [smem:[#allocation0]]
  $region49: #{tpu_custom_call.1} parent=0
    _
  %s6 = ssub.s32 1, %s4
  %s7 = scalar_select 0, %s6, %s4
  $region1: #{tpu_custom_call.1} parent=0
    #allocation2 [shape = 'u8[65536]{0}', space=vmem, size = 0x10000, scoped, tag = 'input window, operand 0']
    #allocation3 [shape = 's32[2]{0}', space=sflag, size = 0x8, scoped, tag = 'scoped memory for tpu_custom_call.1']
    #allocation4 [shape = 's32[2]{0}', space=sflag, size = 0x8, scoped, tag = 'scoped memory for tpu_custom_call.1']
    #allocation5 [shape = 'u8[65536]{0}', space=vmem, size = 0x10000, scoped, tag = 'output window, operand 0']
    %8 = vsyncpa [#allocation3], 0
    %s9 = scalar_lea.sflag [#allocation3], 1
    %10 = vsyncpa %s9, 0
    %11 = vsyncpa [#allocation4], 0
    %s12 = scalar_lea.sflag [#allocation4], 1
    %13 = vsyncpa %s12, 0
    loop: start=0, step=1, limit=4
    $region2: #{tpu_custom_call.1} parent=1 // loop_pre_header
      _
    $region3: #{tpu_custom_call.1} parent=1 // loop_header
      %s15 = sphi 0, %s19
      %p16 = scmp.ge.s32.totalorder %s15, 4
      %s25 = sphi 0, %s27
      %s28 = sphi 0, %s25
      %s29 = sphi 0, %s28
      %s45 = sphi 0, %s29
      %s49 = sphi 0, %s49
      %s51 = sphi 0, %s49
      %s52 = sphi 0, %s51
      %s66 = sphi 0, %s52
      %s70 = sphi 0, %s70
      %s72 = sphi 0, %s70
      %s73 = sphi 0, %s72
      %s87 = sphi 0, %s73
      %s93 = sphi 0, %s95
      %s96 = sphi 0, %s93
      %s97 = sphi 0, %s96
      %s113 = sphi 0, %s97
    $region4: #{tpu_custom_call.1} parent=1 // loop_header_branch
      %18 = sbr.rel (%p16) target = $region8
    $region5: #{tpu_custom_call.1} parent=1 // loop_body
      %s20 = ssub.s32 %s15, 1
      %s21 = ssub.s32 %s15, 2
      %s22 = sadd.s32 %s15, 1
      %s23 = ssub.s32 %s15, %s22
      %p24 = scmp.eq.s32.totalorder %s23, 0
      %s26 = sadd.s32 %s25, 1
      %s27 = scalar_select %p24, %s25, %s26
      %p30 = pneg %p24
      %p31 = scmp.eq.s32.totalorder %s15, 1
      %p32 = por %p30, %p31
      %p33 = scmp.ne.s32.totalorder %s25, %s28
      %p34 = scmp.eq.s32.totalorder %s15, 0
      %p35 = por %p33, %p34
      %p36 = scmp.ne.s32.totalorder %s25, %s28
      %p37 = scmp.eq.s32.totalorder %s20, 1
      %p38 = por %p36, %p37
      %p39 = scmp.ne.s32.totalorder %s28, %s29
      %p40 = scmp.eq.s32.totalorder %s20, 0
      %p41 = por %p39, %p40
      %p42 = scmp.ne.s32.totalorder %s28, %s29
      %p43 = scmp.eq.s32.totalorder %s21, 1
      %p44 = por %p42, %p43
      %p46 = scmp.ne.s32.totalorder %s29, %s45
      %p47 = scmp.eq.s32.totalorder %s21, 0
      %p48 = por %p46, %p47
      %s50 = sadd.s32 %s49, 1
      %p53 = scmp.eq.s32.totalorder %s15, 1
      %p54 = scmp.ne.s32.totalorder %s49, %s51
      %p55 = scmp.eq.s32.totalorder %s15, 0
      %p56 = por %p54, %p55
      %p57 = scmp.ne.s32.totalorder %s49, %s51
      %p58 = scmp.eq.s32.totalorder %s20, 1
      %p59 = por %p57, %p58
      %p60 = scmp.ne.s32.totalorder %s51, %s52
      %p61 = scmp.eq.s32.totalorder %s20, 0
      %p62 = por %p60, %p61
      %p63 = scmp.ne.s32.totalorder %s51, %s52
      %p64 = scmp.eq.s32.totalorder %s21, 1
      %p65 = por %p63, %p64
      %p67 = scmp.ne.s32.totalorder %s52, %s66
      %p68 = scmp.eq.s32.totalorder %s21, 0
      %p69 = por %p67, %p68
      %s71 = sadd.s32 %s70, 1
      %p74 = scmp.eq.s32.totalorder %s15, 1
      %p75 = scmp.ne.s32.totalorder %s70, %s72
      %p76 = scmp.eq.s32.totalorder %s15, 0
      %p77 = por %p75, %p76
      %p78 = scmp.ne.s32.totalorder %s70, %s72
      %p79 = scmp.eq.s32.totalorder %s20, 1
      %p80 = por %p78, %p79
      %p81 = scmp.ne.s32.totalorder %s72, %s73
      %p82 = scmp.eq.s32.totalorder %s20, 0
      %p83 = por %p81, %p82
      %p84 = scmp.ne.s32.totalorder %s72, %s73
      %p85 = scmp.eq.s32.totalorder %s21, 1
      %p86 = por %p84, %p85
      %p88 = scmp.ne.s32.totalorder %s73, %s87
      %p89 = scmp.eq.s32.totalorder %s21, 0
      %p90 = por %p88, %p89
      %s91 = ssub.s32 %s15, %s22
      %p92 = scmp.eq.s32.totalorder %s91, 0
      %s94 = sadd.s32 %s93, 1
      %s95 = scalar_select %p92, %s93, %s94
      %p98 = pneg %p92
      %p99 = scmp.eq.s32.totalorder %s15, 1
      %p100 = por %p98, %p99
      %p101 = scmp.ne.s32.totalorder %s93, %s96
      %p102 = scmp.eq.s32.totalorder %s15, 0
      %p103 = por %p101, %p102
      %p104 = scmp.ne.s32.totalorder %s93, %s96
      %p105 = scmp.eq.s32.totalorder %s20, 1
      %p106 = por %p104, %p105
      %p107 = scmp.ne.s32.totalorder %s96, %s97
      %p108 = scmp.eq.s32.totalorder %s20, 0
      %p109 = por %p107, %p108
      %p110 = scmp.ne.s32.totalorder %s96, %s97
      %p111 = scmp.eq.s32.totalorder %s21, 1
      %p112 = por %p110, %p111
      %p114 = scmp.ne.s32.totalorder %s97, %s113
      %p115 = scmp.eq.s32.totalorder %s21, 0
      %p116 = por %p114, %p115
      %p117 = scmp.le.s32.totalorder 1, %s15
      %p118 = scmp.lt.s32.totalorder %s15, 3
      %p119 = pnand %p117, %p118
      %p120 = pneg %p119
      // Predicated region
      $region9: #{tpu_custom_call.1} parent=5 // pred_check
        _
      $region10: #{tpu_custom_call.1} parent=5 // pred_check_branch
        %122 = sbr.rel (%p119) target = $region12
      $region11: #{tpu_custom_call.1} parent=5 // pred_region
        %s123 = ssub.s32 %s15, 1
        // Predicated region
        $region13: #{tpu_custom_call.1} parent=11 // pred_check
          %p124 = pneg %p62
        $region14: #{tpu_custom_call.1} parent=11 // pred_check_branch
          %126 = sbr.rel (%p124) target = $region16
        $region15: #{tpu_custom_call.1} parent=11 // pred_region
          _
        $region16: #{tpu_custom_call.1} parent=11 // pred_fallthru
          _
        // Predicated region
        $region17: #{tpu_custom_call.1} parent=11 // pred_check
          %p127 = pneg %p83
        $region18: #{tpu_custom_call.1} parent=11 // pred_check_branch
          %129 = sbr.rel (%p127) target = $region20
        $region19: #{tpu_custom_call.1} parent=11 // pred_region
          _
        $region20: #{tpu_custom_call.1} parent=11 // pred_fallthru
          _
      $region12: #{tpu_custom_call.1} parent=5 // pred_fallthru
        _
      %p130 = scmp.lt.s32.totalorder %s15, 2
      // Predicated region
      $region21: #{tpu_custom_call.1} parent=5 // pred_check
        %p131 = pneg %p130
      $region22: #{tpu_custom_call.1} parent=5 // pred_check_branch
        %133 = sbr.rel (%p131) target = $region24
      $region23: #{tpu_custom_call.1} parent=5 // pred_region
        // Predicated region
        $region25: #{tpu_custom_call.1} parent=23 // pred_check
          %p134 = pneg %p35
        $region26: #{tpu_custom_call.1} parent=23 // pred_check_branch
          %136 = sbr.rel (%p134) target = $region28
        $region27: #{tpu_custom_call.1} parent=23 // pred_region
          %s137 = sand.u32 %s25, 1
          %s138 = scalar_lea.sflag [#allocation3], %s137
          %s139 = sand.u32 %s25, 1
          %s140 = smul.addr %s139, 64
          %s141 = scalar_lea.vmem [#allocation2], %s140
          %s143 = ssub.s32 1024, 1024
          %144 = vsyncadd %s138, %s143
          %s145 = smul.addr %s15, 8
          %s146 = smul.addr %s145, 128
          %s147 = scalar_lea.hbm %s0, %s146
          %s148 = sshll.u32 %s141, 4
          %s149 = int_to_ptr.vmem [resolvable:$true] %s148
          %154 = dma.hbm_to_vmem [thread:$0]  %s147, 1024, %s149, %s138, 256, 256, 16
        $region28: #{tpu_custom_call.1} parent=23 // pred_fallthru
          _
      $region24: #{tpu_custom_call.1} parent=5 // pred_fallthru
        _
      %p155 = scmp.le.s32.totalorder 1, %s15
      %p156 = scmp.lt.s32.totalorder %s15, 3
      %p157 = pnand %p155, %p156
      %p158 = pneg %p157
      // Predicated region
      $region29: #{tpu_custom_call.1} parent=5 // pred_check
        _
      $region30: #{tpu_custom_call.1} parent=5 // pred_check_branch
        %160 = sbr.rel (%p157) target = $region32
      $region31: #{tpu_custom_call.1} parent=5 // pred_region
        %s161 = ssub.s32 %s15, 1
        %s162 = sand.u32 %s28, 1
        %s163 = scalar_lea.sflag [#allocation3], %s162
        %s164 = sand.u32 %s28, 1
        %s165 = smul.addr %s164, 64
        %s166 = scalar_lea.vmem [#allocation2], %s165
        // Predicated region
        $region33: #{tpu_custom_call.1} parent=31 // pred_check
          %p167 = pneg %p41
        $region34: #{tpu_custom_call.1} parent=31 // pred_check_branch
          %169 = sbr.rel (%p167) target = $region36
        $region35: #{tpu_custom_call.1} parent=31 // pred_region
          %170 = dma.done %s163, 1024
        $region36: #{tpu_custom_call.1} parent=31 // pred_fallthru
          _
        %s171 = sand.u32 %s28, 1
        %s172 = scalar_lea.sflag [#allocation3], %s171
        %s173 = sand.u32 %s28, 1
        %s174 = smul.addr %s173, 64
        %s175 = scalar_lea.vmem [#allocation2], %s174
        %p176 = pneg %p41
        %p177 = pneg %p38
        %p178 = pneg %p62
        %p179 = pneg %p59
        %p180 = pneg %p83
        %p181 = pneg %p80
        %p182 = pneg %p109
        %p183 = pneg %p106
        %s184 = sand.u32 %s96, 1
        %s185 = scalar_lea.sflag [#allocation4], %s184
        %s186 = sand.u32 %s96, 1
        %s187 = smul.addr %s186, 64
        %s188 = scalar_lea.vmem [#allocation5], %s187
        %v189 = vld [vmem:[%s166] sm:$0xff]
        %v190 = vld [vmem:[%s166 + $0x8] sm:$0xff]
        %v191 = vld [vmem:[%s166 + $0x10] sm:$0xff]
        %v192 = vld [vmem:[%s166 + $0x18] sm:$0xff]
        %v193 = vld [vmem:[%s166 + $0x20] sm:$0xff]
        %v194 = vld [vmem:[%s166 + $0x28] sm:$0xff]
        %v195 = vld [vmem:[%s166 + $0x30] sm:$0xff]
        %v196 = vld [vmem:[%s166 + $0x38] sm:$0xff]
        %v197 = vadd.f32 %v189, %v190
        %198 = vadd.xlane.f32.xlu0 %v197
        %v199 = vpop.xlane.xlu0 %198
        %v200 = vadd.f32 %v191, %v192
        %201 = vadd.xlane.f32.xlu0 %v200
        %v202 = vpop.xlane.xlu0 %201
        %v203 = vadd.f32 %v193, %v194
        %204 = vadd.xlane.f32.xlu0 %v203
        %v205 = vpop.xlane.xlu0 %204
        %v206 = vadd.f32 %v195, %v196
        %207 = vadd.xlane.f32.xlu0 %v206
        %v208 = vpop.xlane.xlu0 %207
        %v209 = vrcp.pop 256.0
        %v210 = vmul.f32 %v199, %v209
        %v211 = vmul.f32 %v202, %v209
        %v212 = vmul.f32 %v205, %v209
        %v213 = vmul.f32 %v208, %v209
        %v214 = vld [vmem:[%s1] sm:$0x3]
        %v216 = vlaneseq
        %v217 = vshrl.u32 %v216, 7
        %v218 = vsub.s32 0, %v217
        %v219 = vrot.slane %v214, %v218
        %221 = vbcast.lane.b32.xlu0 %v219, 256
        %v222 = vpop.permute.xlu0 %221
        %s224 = sor.u32 256, 8
        %225 = vbcast.lane.b32.xlu0 %v219, %s224
        %v226 = vpop.permute.xlu0 %225
        %s228 = sor.u32 256, 16
        %229 = vbcast.lane.b32.xlu0 %v219, %s228
        %v230 = vpop.permute.xlu0 %229
        %s232 = sor.u32 256, 24
        %233 = vbcast.lane.b32.xlu0 %v219, %s232
        %v234 = vpop.permute.xlu0 %233
        %v235 = vlaneseq
        %v236 = vshrl.u32 %v235, 7
        %v237 = vsub.s32 1, %v236
        %v238 = vrot.slane %v214, %v237
        %240 = vbcast.lane.b32.xlu0 %v238, 256
        %v241 = vpop.permute.xlu0 %240
        %s243 = sor.u32 256, 8
        %244 = vbcast.lane.b32.xlu0 %v238, %s243
        %v245 = vpop.permute.xlu0 %244
        %s247 = sor.u32 256, 16
        %248 = vbcast.lane.b32.xlu0 %v238, %s247
        %v249 = vpop.permute.xlu0 %248
        %s251 = sor.u32 256, 24
        %252 = vbcast.lane.b32.xlu0 %v238, %s251
        %v253 = vpop.permute.xlu0 %252
        %v262 = vmul.f32 %v210, %v222
        %v263 = vmul.f32 %v211, %v226
        %v264 = vmul.f32 %v212, %v230
        %v265 = vmul.f32 %v213, %v234
        %v266 = vmul.f32 %v210, %v241
        %v267 = vmul.f32 %v211, %v245
        %v268 = vmul.f32 %v212, %v249
        %v269 = vmul.f32 %v213, %v253
        %278 = vset.pattern.permute.xlu0 0
        %279 = vperm.xlu0 %278, %v262
        %v280 = vpop.permute.xlu0 %279
        %281 = vset.pattern.permute.xlu0 0
        %282 = vperm.xlu0 %281, %v263
        %v283 = vpop.permute.xlu0 %282
        %284 = vset.pattern.permute.xlu0 0
        %285 = vperm.xlu0 %284, %v264
        %v286 = vpop.permute.xlu0 %285
        %287 = vset.pattern.permute.xlu0 0
        %288 = vperm.xlu0 %287, %v265
        %v289 = vpop.permute.xlu0 %288
        %290 = vset.pattern.permute.xlu0 0
        %291 = vperm.xlu0 %290, %v266
        %v292 = vpop.permute.xlu0 %291
        %293 = vset.pattern.permute.xlu0 0
        %294 = vperm.xlu0 %293, %v267
        %v295 = vpop.permute.xlu0 %294
        %296 = vset.pattern.permute.xlu0 0
        %297 = vperm.xlu0 %296, %v268
        %v298 = vpop.permute.xlu0 %297
        %299 = vset.pattern.permute.xlu0 0
        %300 = vperm.xlu0 %299, %v269
        %v301 = vpop.permute.xlu0 %300
        %v302 = vlaneseq
        %v303 = vand.u32 %v302, 127
        %v304 = vlaneseq
        %v305 = vshrl.u32 %v304, 7
        %v306 = vsub.s32 %v303, %v305
        %v307 = vrot.slane %v280, %v306
        %v308 = vadd.s32 %v303, 4294967288
        %v309 = vlaneseq
        %v310 = vshrl.u32 %v309, 7
        %v311 = vsub.s32 %v308, %v310
        %v312 = vrot.slane %v283, %v311
        %vm313 = vcmask 130112
        %v314 = vsel %vm313, %v312, %v307
        %v315 = vadd.s32 %v303, 4294967280
        %v316 = vlaneseq
        %v317 = vshrl.u32 %v316, 7
        %v318 = vsub.s32 %v315, %v317
        %v319 = vrot.slane %v286, %v318
        %vm320 = vcmask 195712
        %v321 = vsel %vm320, %v319, %v314
        %v322 = vadd.s32 %v303, 4294967272
        %v323 = vlaneseq
        %v324 = vshrl.u32 %v323, 7
        %v325 = vsub.s32 %v322, %v324
        %v326 = vrot.slane %v289, %v325
        %vm327 = vcmask 261312
        %v328 = vsel %vm327, %v326, %v321
        %v329 = vlaneseq
        %v330 = vshrl.u32 %v329, 7
        %v331 = vsub.s32 %v303, %v330
        %v332 = vrot.slane %v292, %v331
        %v333 = vlaneseq
        %v334 = vshrl.u32 %v333, 7
        %v335 = vsub.s32 %v308, %v334
        %v336 = vrot.slane %v295, %v335
        %v337 = vsel %vm313, %v336, %v332
        %v338 = vlaneseq
        %v339 = vshrl.u32 %v338, 7
        %v340 = vsub.s32 %v315, %v339
        %v341 = vrot.slane %v298, %v340
        %v342 = vsel %vm320, %v341, %v337
        %v343 = vlaneseq
        %v344 = vshrl.u32 %v343, 7
        %v345 = vsub.s32 %v322, %v344
        %v346 = vrot.slane %v301, %v345
        %v347 = vsel %vm327, %v346, %v342
        %vm348 = vcmask 1041409
        %v349 = vsel %vm348, %v347, %v328
        %vm351 = vcmask 254976
        %v352 = vsel %vm351, %v349, 0.0
        %353 = vadd.xlane.f32.xlu0 %v352
        %v354 = vpop.xlane.xlu0 %353
        %v355 = vmax.f32 %v354, 0.0
        %v356 = vld [vmem:[%s2] sm:$0xff]
        %v357 = vld [vmem:[%s2 + $0x8] sm:$0xff]
        %v358 = vld [vmem:[%s2 + $0x10] sm:$0xff]
        %v359 = vld [vmem:[%s2 + $0x18] sm:$0xff]
        %v364 = vlaneseq
        %v365 = vshrl.u32 %v364, 7
        %v366 = vsub.s32 0, %v365
        %v367 = vrot.slane %v356, %v366
        %369 = vbcast.lane.b32.xlu0 %v367, 256
        %v370 = vpop.permute.xlu0 %369
        %v371 = vlaneseq
        %v372 = vshrl.u32 %v371, 7
        %v373 = vsub.s32 1, %v372
        %v374 = vrot.slane %v356, %v373
        %376 = vbcast.lane.b32.xlu0 %v374, 256
        %v377 = vpop.permute.xlu0 %376
        %v378 = vlaneseq
        %v379 = vshrl.u32 %v378, 7
        %v380 = vsub.s32 2, %v379
        %v381 = vrot.slane %v356, %v380
        %383 = vbcast.lane.b32.xlu0 %v381, 256
        %v384 = vpop.permute.xlu0 %383
        %v385 = vlaneseq
        %v386 = vshrl.u32 %v385, 7
        %v387 = vsub.s32 3, %v386
        %v388 = vrot.slane %v356, %v387
        %390 = vbcast.lane.b32.xlu0 %v388, 256
        %v391 = vpop.permute.xlu0 %390
        %v392 = vlaneseq
        %v393 = vshrl.u32 %v392, 7
        %v394 = vsub.s32 4, %v393
        %v395 = vrot.slane %v356, %v394
        %397 = vbcast.lane.b32.xlu0 %v395, 256
        %v398 = vpop.permute.xlu0 %397
        %v399 = vlaneseq
        %v400 = vshrl.u32 %v399, 7
        %v401 = vsub.s32 5, %v400
        %v402 = vrot.slane %v356, %v401
        %404 = vbcast.lane.b32.xlu0 %v402, 256
        %v405 = vpop.permute.xlu0 %404
        %v406 = vlaneseq
        %v407 = vshrl.u32 %v406, 7
        %v408 = vsub.s32 6, %v407
        %v409 = vrot.slane %v356, %v408
        %411 = vbcast.lane.b32.xlu0 %v409, 256
        %v412 = vpop.permute.xlu0 %411
        %v413 = vlaneseq
        %v414 = vshrl.u32 %v413, 7
        %v415 = vsub.s32 7, %v414
        %v416 = vrot.slane %v356, %v415
        %418 = vbcast.lane.b32.xlu0 %v416, 256
        %v419 = vpop.permute.xlu0 %418
        %v420 = vlaneseq
        %v421 = vshrl.u32 %v420, 7
        %v422 = vsub.s32 0, %v421
        %v423 = vrot.slane %v357, %v422
        %425 = vbcast.lane.b32.xlu0 %v423, 256
        %v426 = vpop.permute.xlu0 %425
        %v427 = vlaneseq
        %v428 = vshrl.u32 %v427, 7
        %v429 = vsub.s32 1, %v428
        %v430 = vrot.slane %v357, %v429
        %432 = vbcast.lane.b32.xlu0 %v430, 256
        %v433 = vpop.permute.xlu0 %432
        %v434 = vlaneseq
        %v435 = vshrl.u32 %v434, 7
        %v436 = vsub.s32 2, %v435
        %v437 = vrot.slane %v357, %v436
        %439 = vbcast.lane.b32.xlu0 %v437, 256
        %v440 = vpop.permute.xlu0 %439
        %v441 = vlaneseq
        %v442 = vshrl.u32 %v441, 7
        %v443 = vsub.s32 3, %v442
        %v444 = vrot.slane %v357, %v443
        %446 = vbcast.lane.b32.xlu0 %v444, 256
        %v447 = vpop.permute.xlu0 %446
        %v448 = vlaneseq
        %v449 = vshrl.u32 %v448, 7
        %v450 = vsub.s32 4, %v449
        %v451 = vrot.slane %v357, %v450
        %453 = vbcast.lane.b32.xlu0 %v451, 256
        %v454 = vpop.permute.xlu0 %453
        %v455 = vlaneseq
        %v456 = vshrl.u32 %v455, 7
        %v457 = vsub.s32 5, %v456
        %v458 = vrot.slane %v357, %v457
        %460 = vbcast.lane.b32.xlu0 %v458, 256
        %v461 = vpop.permute.xlu0 %460
        %v462 = vlaneseq
        %v463 = vshrl.u32 %v462, 7
        %v464 = vsub.s32 6, %v463
        %v465 = vrot.slane %v357, %v464
        %467 = vbcast.lane.b32.xlu0 %v465, 256
        %v468 = vpop.permute.xlu0 %467
        %v469 = vlaneseq
        %v470 = vshrl.u32 %v469, 7
        %v471 = vsub.s32 7, %v470
        %v472 = vrot.slane %v357, %v471
        %474 = vbcast.lane.b32.xlu0 %v472, 256
        %v475 = vpop.permute.xlu0 %474
        %v476 = vlaneseq
        %v477 = vshrl.u32 %v476, 7
        %v478 = vsub.s32 0, %v477
        %v479 = vrot.slane %v358, %v478
        %481 = vbcast.lane.b32.xlu0 %v479, 256
        %v482 = vpop.permute.xlu0 %481
        %v483 = vlaneseq
        %v484 = vshrl.u32 %v483, 7
        %v485 = vsub.s32 1, %v484
        %v486 = vrot.slane %v358, %v485
        %488 = vbcast.lane.b32.xlu0 %v486, 256
        %v489 = vpop.permute.xlu0 %488
        %v490 = vlaneseq
        %v491 = vshrl.u32 %v490, 7
        %v492 = vsub.s32 2, %v491
        %v493 = vrot.slane %v358, %v492
        %495 = vbcast.lane.b32.xlu0 %v493, 256
        %v496 = vpop.permute.xlu0 %495
        %v497 = vlaneseq
        %v498 = vshrl.u32 %v497, 7
        %v499 = vsub.s32 3, %v498
        %v500 = vrot.slane %v358, %v499
        %502 = vbcast.lane.b32.xlu0 %v500, 256
        %v503 = vpop.permute.xlu0 %502
        %v504 = vlaneseq
        %v505 = vshrl.u32 %v504, 7
        %v506 = vsub.s32 4, %v505
        %v507 = vrot.slane %v358, %v506
        %509 = vbcast.lane.b32.xlu0 %v507, 256
        %v510 = vpop.permute.xlu0 %509
        %v511 = vlaneseq
        %v512 = vshrl.u32 %v511, 7
        %v513 = vsub.s32 5, %v512
        %v514 = vrot.slane %v358, %v513
        %516 = vbcast.lane.b32.xlu0 %v514, 256
        %v517 = vpop.permute.xlu0 %516
        %v518 = vlaneseq
        %v519 = vshrl.u32 %v518, 7
        %v520 = vsub.s32 6, %v519
        %v521 = vrot.slane %v358, %v520
        %523 = vbcast.lane.b32.xlu0 %v521, 256
        %v524 = vpop.permute.xlu0 %523
        %v525 = vlaneseq
        %v526 = vshrl.u32 %v525, 7
        %v527 = vsub.s32 7, %v526
        %v528 = vrot.slane %v358, %v527
        %530 = vbcast.lane.b32.xlu0 %v528, 256
        %v531 = vpop.permute.xlu0 %530
        %v532 = vlaneseq
        %v533 = vshrl.u32 %v532, 7
        %v534 = vsub.s32 0, %v533
        %v535 = vrot.slane %v359, %v534
        %537 = vbcast.lane.b32.xlu0 %v535, 256
        %v538 = vpop.permute.xlu0 %537
        %v539 = vlaneseq
        %v540 = vshrl.u32 %v539, 7
        %v541 = vsub.s32 1, %v540
        %v542 = vrot.slane %v359, %v541
        %544 = vbcast.lane.b32.xlu0 %v542, 256
        %v545 = vpop.permute.xlu0 %544
        %v546 = vlaneseq
        %v547 = vshrl.u32 %v546, 7
        %v548 = vsub.s32 2, %v547
        %v549 = vrot.slane %v359, %v548
        %551 = vbcast.lane.b32.xlu0 %v549, 256
        %v552 = vpop.permute.xlu0 %551
        %v553 = vlaneseq
        %v554 = vshrl.u32 %v553, 7
        %v555 = vsub.s32 3, %v554
        %v556 = vrot.slane %v359, %v555
        %558 = vbcast.lane.b32.xlu0 %v556, 256
        %v559 = vpop.permute.xlu0 %558
        %v560 = vlaneseq
        %v561 = vshrl.u32 %v560, 7
        %v562 = vsub.s32 4, %v561
        %v563 = vrot.slane %v359, %v562
        %565 = vbcast.lane.b32.xlu0 %v563, 256
        %v566 = vpop.permute.xlu0 %565
        %v567 = vlaneseq
        %v568 = vshrl.u32 %v567, 7
        %v569 = vsub.s32 5, %v568
        %v570 = vrot.slane %v359, %v569
        %572 = vbcast.lane.b32.xlu0 %v570, 256
        %v573 = vpop.permute.xlu0 %572
        %v574 = vlaneseq
        %v575 = vshrl.u32 %v574, 7
        %v576 = vsub.s32 6, %v575
        %v577 = vrot.slane %v359, %v576
        %579 = vbcast.lane.b32.xlu0 %v577, 256
        %v580 = vpop.permute.xlu0 %579
        %v581 = vlaneseq
        %v582 = vshrl.u32 %v581, 7
        %v583 = vsub.s32 7, %v582
        %v584 = vrot.slane %v359, %v583
        %586 = vbcast.lane.b32.xlu0 %v584, 256
        %v587 = vpop.permute.xlu0 %586
        %v620 = vmul.f32 %v355, %v370
        %v621 = vmul.f32 %v355, %v377
        %v622 = vmul.f32 %v355, %v384
        %v623 = vmul.f32 %v355, %v391
        %v624 = vmul.f32 %v355, %v398
        %v625 = vmul.f32 %v355, %v405
        %v626 = vmul.f32 %v355, %v412
        %v627 = vmul.f32 %v355, %v419
        %v628 = vmul.f32 %v355, %v426
        %v629 = vmul.f32 %v355, %v433
        %v630 = vmul.f32 %v355, %v440
        %v631 = vmul.f32 %v355, %v447
        %v632 = vmul.f32 %v355, %v454
        %v633 = vmul.f32 %v355, %v461
        %v634 = vmul.f32 %v355, %v468
        %v635 = vmul.f32 %v355, %v475
        %v636 = vmul.f32 %v355, %v482
        %v637 = vmul.f32 %v355, %v489
        %v638 = vmul.f32 %v355, %v496
        %v639 = vmul.f32 %v355, %v503
        %v640 = vmul.f32 %v355, %v510
        %v641 = vmul.f32 %v355, %v517
        %v642 = vmul.f32 %v355, %v524
        %v643 = vmul.f32 %v355, %v531
        %v644 = vmul.f32 %v355, %v538
        %v645 = vmul.f32 %v355, %v545
        %v646 = vmul.f32 %v355, %v552
        %v647 = vmul.f32 %v355, %v559
        %v648 = vmul.f32 %v355, %v566
        %v649 = vmul.f32 %v355, %v573
        %v650 = vmul.f32 %v355, %v580
        %v651 = vmul.f32 %v355, %v587
        %684 = vset.pattern.permute.xlu0 0
        %685 = vperm.xlu0 %684, %v620
        %v686 = vpop.permute.xlu0 %685
        %687 = vset.pattern.permute.xlu0 0
        %688 = vperm.xlu0 %687, %v621
        %v689 = vpop.permute.xlu0 %688
        %690 = vset.pattern.permute.xlu0 0
        %691 = vperm.xlu0 %690, %v622
        %v692 = vpop.permute.xlu0 %691
        %693 = vset.pattern.permute.xlu0 0
        %694 = vperm.xlu0 %693, %v623
        %v695 = vpop.permute.xlu0 %694
        %696 = vset.pattern.permute.xlu0 0
        %697 = vperm.xlu0 %696, %v624
        %v698 = vpop.permute.xlu0 %697
        %699 = vset.pattern.permute.xlu0 0
        %700 = vperm.xlu0 %699, %v625
        %v701 = vpop.permute.xlu0 %700
        %702 = vset.pattern.permute.xlu0 0
        %703 = vperm.xlu0 %702, %v626
        %v704 = vpop.permute.xlu0 %703
        %705 = vset.pattern.permute.xlu0 0
        %706 = vperm.xlu0 %705, %v627
        %v707 = vpop.permute.xlu0 %706
        %708 = vset.pattern.permute.xlu0 0
        %709 = vperm.xlu0 %708, %v628
        %v710 = vpop.permute.xlu0 %709
        %711 = vset.pattern.permute.xlu0 0
        %712 = vperm.xlu0 %711, %v629
        %v713 = vpop.permute.xlu0 %712
        %714 = vset.pattern.permute.xlu0 0
        %715 = vperm.xlu0 %714, %v630
        %v716 = vpop.permute.xlu0 %715
        %717 = vset.pattern.permute.xlu0 0
        %718 = vperm.xlu0 %717, %v631
        %v719 = vpop.permute.xlu0 %718
        %720 = vset.pattern.permute.xlu0 0
        %721 = vperm.xlu0 %720, %v632
        %v722 = vpop.permute.xlu0 %721
        %723 = vset.pattern.permute.xlu0 0
        %724 = vperm.xlu0 %723, %v633
        %v725 = vpop.permute.xlu0 %724
        %726 = vset.pattern.permute.xlu0 0
        %727 = vperm.xlu0 %726, %v634
        %v728 = vpop.permute.xlu0 %727
        %729 = vset.pattern.permute.xlu0 0
        %730 = vperm.xlu0 %729, %v635
        %v731 = vpop.permute.xlu0 %730
        %732 = vset.pattern.permute.xlu0 0
        %733 = vperm.xlu0 %732, %v636
        %v734 = vpop.permute.xlu0 %733
        %735 = vset.pattern.permute.xlu0 0
        %736 = vperm.xlu0 %735, %v637
        %v737 = vpop.permute.xlu0 %736
        %738 = vset.pattern.permute.xlu0 0
        %739 = vperm.xlu0 %738, %v638
        %v740 = vpop.permute.xlu0 %739
        %741 = vset.pattern.permute.xlu0 0
        %742 = vperm.xlu0 %741, %v639
        %v743 = vpop.permute.xlu0 %742
        %744 = vset.pattern.permute.xlu0 0
        %745 = vperm.xlu0 %744, %v640
        %v746 = vpop.permute.xlu0 %745
        %747 = vset.pattern.permute.xlu0 0
        %748 = vperm.xlu0 %747, %v641
        %v749 = vpop.permute.xlu0 %748
        %750 = vset.pattern.permute.xlu0 0
        %751 = vperm.xlu0 %750, %v642
        %v752 = vpop.permute.xlu0 %751
        %753 = vset.pattern.permute.xlu0 0
        %754 = vperm.xlu0 %753, %v643
        %v755 = vpop.permute.xlu0 %754
        %756 = vset.pattern.permute.xlu0 0
        %757 = vperm.xlu0 %756, %v644
        %v758 = vpop.permute.xlu0 %757
        %759 = vset.pattern.permute.xlu0 0
        %760 = vperm.xlu0 %759, %v645
        %v761 = vpop.permute.xlu0 %760
        %762 = vset.pattern.permute.xlu0 0
        %763 = vperm.xlu0 %762, %v646
        %v764 = vpop.permute.xlu0 %763
        %765 = vset.pattern.permute.xlu0 0
        %766 = vperm.xlu0 %765, %v647
        %v767 = vpop.permute.xlu0 %766
        %768 = vset.pattern.permute.xlu0 0
        %769 = vperm.xlu0 %768, %v648
        %v770 = vpop.permute.xlu0 %769
        %771 = vset.pattern.permute.xlu0 0
        %772 = vperm.xlu0 %771, %v649
        %v773 = vpop.permute.xlu0 %772
        %774 = vset.pattern.permute.xlu0 0
        %775 = vperm.xlu0 %774, %v650
        %v776 = vpop.permute.xlu0 %775
        %777 = vset.pattern.permute.xlu0 0
        %778 = vperm.xlu0 %777, %v651
        %v779 = vpop.permute.xlu0 %778
        %v780 = vlaneseq
        %v781 = vshrl.u32 %v780, 7
        %v782 = vsub.s32 %v303, %v781
        %v783 = vrot.slane %v686, %v782
        %v784 = vlaneseq
        %v785 = vshrl.u32 %v784, 7
        %v786 = vsub.s32 %v303, %v785
        %v787 = vrot.slane %v689, %v786
        %v788 = vlaneseq
        %v789 = vshrl.u32 %v788, 7
        %v790 = vsub.s32 %v303, %v789
        %v791 = vrot.slane %v692, %v790
        %v792 = vlaneseq
        %v793 = vshrl.u32 %v792, 7
        %v794 = vsub.s32 %v303, %v793
        %v795 = vrot.slane %v695, %v794
        %v796 = vlaneseq
        %v797 = vshrl.u32 %v796, 7
        %v798 = vsub.s32 %v303, %v797
        %v799 = vrot.slane %v698, %v798
        %v800 = vlaneseq
        %v801 = vshrl.u32 %v800, 7
        %v802 = vsub.s32 %v303, %v801
        %v803 = vrot.slane %v701, %v802
        %v804 = vlaneseq
        %v805 = vshrl.u32 %v804, 7
        %v806 = vsub.s32 %v303, %v805
        %v807 = vrot.slane %v704, %v806
        %v808 = vlaneseq
        %v809 = vshrl.u32 %v808, 7
        %v810 = vsub.s32 %v303, %v809
        %v811 = vrot.slane %v707, %v810
        %v812 = vlaneseq
        %v813 = vshrl.u32 %v812, 7
        %v814 = vsub.s32 %v303, %v813
        %v815 = vrot.slane %v710, %v814
        %v816 = vlaneseq
        %v817 = vshrl.u32 %v816, 7
        %v818 = vsub.s32 %v303, %v817
        %v819 = vrot.slane %v713, %v818
        %v820 = vlaneseq
        %v821 = vshrl.u32 %v820, 7
        %v822 = vsub.s32 %v303, %v821
        %v823 = vrot.slane %v716, %v822
        %v824 = vlaneseq
        %v825 = vshrl.u32 %v824, 7
        %v826 = vsub.s32 %v303, %v825
        %v827 = vrot.slane %v719, %v826
        %v828 = vlaneseq
        %v829 = vshrl.u32 %v828, 7
        %v830 = vsub.s32 %v303, %v829
        %v831 = vrot.slane %v722, %v830
        %v832 = vlaneseq
        %v833 = vshrl.u32 %v832, 7
        %v834 = vsub.s32 %v303, %v833
        %v835 = vrot.slane %v725, %v834
        %v836 = vlaneseq
        %v837 = vshrl.u32 %v836, 7
        %v838 = vsub.s32 %v303, %v837
        %v839 = vrot.slane %v728, %v838
        %v840 = vlaneseq
        %v841 = vshrl.u32 %v840, 7
        %v842 = vsub.s32 %v303, %v841
        %v843 = vrot.slane %v731, %v842
        %v844 = vlaneseq
        %v845 = vshrl.u32 %v844, 7
        %v846 = vsub.s32 %v303, %v845
        %v847 = vrot.slane %v734, %v846
        %v848 = vlaneseq
        %v849 = vshrl.u32 %v848, 7
        %v850 = vsub.s32 %v303, %v849
        %v851 = vrot.slane %v737, %v850
        %v852 = vlaneseq
        %v853 = vshrl.u32 %v852, 7
        %v854 = vsub.s32 %v303, %v853
        %v855 = vrot.slane %v740, %v854
        %v856 = vlaneseq
        %v857 = vshrl.u32 %v856, 7
        %v858 = vsub.s32 %v303, %v857
        %v859 = vrot.slane %v743, %v858
        %v860 = vlaneseq
        %v861 = vshrl.u32 %v860, 7
        %v862 = vsub.s32 %v303, %v861
        %v863 = vrot.slane %v746, %v862
        %v864 = vlaneseq
        %v865 = vshrl.u32 %v864, 7
        %v866 = vsub.s32 %v303, %v865
        %v867 = vrot.slane %v749, %v866
        %v868 = vlaneseq
        %v869 = vshrl.u32 %v868, 7
        %v870 = vsub.s32 %v303, %v869
        %v871 = vrot.slane %v752, %v870
        %v872 = vlaneseq
        %v873 = vshrl.u32 %v872, 7
        %v874 = vsub.s32 %v303, %v873
        %v875 = vrot.slane %v755, %v874
        %v876 = vlaneseq
        %v877 = vshrl.u32 %v876, 7
        %v878 = vsub.s32 %v303, %v877
        %v879 = vrot.slane %v758, %v878
        %v880 = vlaneseq
        %v881 = vshrl.u32 %v880, 7
        %v882 = vsub.s32 %v303, %v881
        %v883 = vrot.slane %v761, %v882
        %v884 = vlaneseq
        %v885 = vshrl.u32 %v884, 7
        %v886 = vsub.s32 %v303, %v885
        %v887 = vrot.slane %v764, %v886
        %v888 = vlaneseq
        %v889 = vshrl.u32 %v888, 7
        %v890 = vsub.s32 %v303, %v889
        %v891 = vrot.slane %v767, %v890
        %v892 = vlaneseq
        %v893 = vshrl.u32 %v892, 7
        %v894 = vsub.s32 %v303, %v893
        %v895 = vrot.slane %v770, %v894
        %v896 = vlaneseq
        %v897 = vshrl.u32 %v896, 7
        %v898 = vsub.s32 %v303, %v897
        %v899 = vrot.slane %v773, %v898
        %v900 = vlaneseq
        %v901 = vshrl.u32 %v900, 7
        %v902 = vsub.s32 %v303, %v901
        %v903 = vrot.slane %v776, %v902
        %v904 = vlaneseq
        %v905 = vshrl.u32 %v904, 7
        %v906 = vsub.s32 %v303, %v905
        %v907 = vrot.slane %v779, %v906
        %v908 = vsel %vm348, %v787, %v783
        %vm909 = vcmask 1042434
        %v910 = vsel %vm909, %v791, %v908
        %vm911 = vcmask 1043459
        %v912 = vsel %vm911, %v795, %v910
        %vm913 = vcmask 1044484
        %v914 = vsel %vm913, %v799, %v912
        %vm915 = vcmask 1045509
        %v916 = vsel %vm915, %v803, %v914
        %vm917 = vcmask 1046534
        %v918 = vsel %vm917, %v807, %v916
        %vm919 = vcmask 1047559
        %v920 = vsel %vm919, %v811, %v918
        %v921 = vsel %vm348, %v819, %v815
        %v922 = vsel %vm909, %v823, %v921
        %v923 = vsel %vm911, %v827, %v922
        %v924 = vsel %vm913, %v831, %v923
        %v925 = vsel %vm915, %v835, %v924
        %v926 = vsel %vm917, %v839, %v925
        %v927 = vsel %vm919, %v843, %v926
        %v928 = vsel %vm348, %v851, %v847
        %v929 = vsel %vm909, %v855, %v928
        %v930 = vsel %vm911, %v859, %v929
        %v931 = vsel %vm913, %v863, %v930
        %v932 = vsel %vm915, %v867, %v931
        %v933 = vsel %vm917, %v871, %v932
        %v934 = vsel %vm919, %v875, %v933
        %v935 = vsel %vm348, %v883, %v879
        %v936 = vsel %vm909, %v887, %v935
        %v937 = vsel %vm911, %v891, %v936
        %v938 = vsel %vm913, %v895, %v937
        %v939 = vsel %vm915, %v899, %v938
        %v940 = vsel %vm917, %v903, %v939
        %v941 = vsel %vm919, %v907, %v940
        %vm946 = vcmask 15360
        %v947 = vsel %vm946, %v920, 0.0
        %948 = vadd.xlane.f32.xlu0 %v947
        %v949 = vpop.xlane.xlu0 %948
        %v950 = vsel %vm946, %v927, 0.0
        %951 = vadd.xlane.f32.xlu0 %v950
        %v952 = vpop.xlane.xlu0 %951
        %v953 = vsel %vm946, %v934, 0.0
        %954 = vadd.xlane.f32.xlu0 %v953
        %v955 = vpop.xlane.xlu0 %954
        %v956 = vsel %vm946, %v941, 0.0
        %957 = vadd.xlane.f32.xlu0 %v956
        %v958 = vpop.xlane.xlu0 %957
        %v959 = vxor.u32 %v949, 2147483648
        %v960 = vxor.u32 %v952, 2147483648
        %v961 = vxor.u32 %v955, 2147483648
        %v962 = vxor.u32 %v958, 2147483648
        %v963 = vmul.f32 %v959, 1.442695
        %v964 = vpow.pop %v963
        %v965 = vmul.f32 %v960, 1.442695
        %v966 = vpow.pop %v965
        %v967 = vmul.f32 %v961, 1.442695
        %v968 = vpow.pop %v967
        %v969 = vmul.f32 %v962, 1.442695
        %v970 = vpow.pop %v969
        %v971 = vadd.f32 %v964, 1.0
        %v972 = vadd.f32 %v966, 1.0
        %v973 = vadd.f32 %v968, 1.0
        %v974 = vadd.f32 %v970, 1.0
        %v975 = vrcp.pop %v971
        %v976 = vmul.f32 1.0, %v975
        %v977 = vrcp.pop %v972
        %v978 = vmul.f32 1.0, %v977
        %v979 = vrcp.pop %v973
        %v980 = vmul.f32 1.0, %v979
        %v981 = vrcp.pop %v974
        %v982 = vmul.f32 1.0, %v981
        %v983 = vmul.f32 %v189, %v976
        %v984 = vmul.f32 %v190, %v976
        %v985 = vmul.f32 %v191, %v978
        %v986 = vmul.f32 %v192, %v978
        %v987 = vmul.f32 %v193, %v980
        %v988 = vmul.f32 %v194, %v980
        %v989 = vmul.f32 %v195, %v982
        %v990 = vmul.f32 %v196, %v982
        %991 = vst [vmem:[%s188] sm:$0xff] %v983
        %992 = vst [vmem:[%s188 + $0x8] sm:$0xff] %v984
        %993 = vst [vmem:[%s188 + $0x10] sm:$0xff] %v985
        %994 = vst [vmem:[%s188 + $0x18] sm:$0xff] %v986
        %995 = vst [vmem:[%s188 + $0x20] sm:$0xff] %v987
        %996 = vst [vmem:[%s188 + $0x28] sm:$0xff] %v988
        %997 = vst [vmem:[%s188 + $0x30] sm:$0xff] %v989
        %998 = vst [vmem:[%s188 + $0x38] sm:$0xff] %v990
        %s999 = sand.u32 %s96, 1
        %s1000 = scalar_lea.sflag [#allocation4], %s999
        %s1001 = sand.u32 %s96, 1
        %s1002 = smul.addr %s1001, 64
        %s1003 = scalar_lea.vmem [#allocation5], %s1002
        // Predicated region
        $region37: #{tpu_custom_call.1} parent=31 // pred_check
          %p1004 = pneg %p106
        $region38: #{tpu_custom_call.1} parent=31 // pred_check_branch
          %1006 = sbr.rel (%p1004) target = $region40
        $region39: #{tpu_custom_call.1} parent=31 // pred_region
          %s1008 = ssub.s32 1024, 1024
          %1009 = vsyncadd %s1000, %s1008
          %s1010 = smul.addr %s20, 8
          %s1011 = smul.addr %s1010, 128
          %s1012 = scalar_lea.hbm %s3, %s1011
          %s1013 = sshll.u32 %s1003, 4
          %s1014 = int_to_ptr.vmem [resolvable:$true] %s1013
          %1019 = dma.vmem_to_hbm [thread:$0]  %s1014, 1024, %s1012, %s1000, 256, 256, 16
        $region40: #{tpu_custom_call.1} parent=31 // pred_fallthru
          _
      $region32: #{tpu_custom_call.1} parent=5 // pred_fallthru
        _
      %p1020 = scmp.le.s32.totalorder 2, %s15
      // Predicated region
      $region41: #{tpu_custom_call.1} parent=5 // pred_check
        %p1021 = pneg %p1020
      $region42: #{tpu_custom_call.1} parent=5 // pred_check_branch
        %1023 = sbr.rel (%p1021) target = $region44
      $region43: #{tpu_custom_call.1} parent=5 // pred_region
        %s1024 = ssub.s32 %s15, 2
        // Predicated region
        $region45: #{tpu_custom_call.1} parent=43 // pred_check
          %p1025 = pneg %p112
        $region46: #{tpu_custom_call.1} parent=43 // pred_check_branch
          %1027 = sbr.rel (%p1025) target = $region48
        $region47: #{tpu_custom_call.1} parent=43 // pred_region
          %s1028 = sand.u32 %s97, 1
          %s1029 = scalar_lea.sflag [#allocation4], %s1028
          %s1030 = sand.u32 %s97, 1
          %s1031 = smul.addr %s1030, 64
          %s1032 = scalar_lea.vmem [#allocation5], %s1031
          %1033 = dma.done %s1029, 1024
        $region48: #{tpu_custom_call.1} parent=43 // pred_fallthru
          _
      $region44: #{tpu_custom_call.1} parent=5 // pred_fallthru
        _
    $region6: #{tpu_custom_call.1} parent=1 // loop_footer
      %s19 = sadd.s32 1, %s15
    $region7: #{tpu_custom_call.1} parent=1 // loop_footer_branch
      %14 = sbr.rel target = $region3
    $region8: #{tpu_custom_call.1} parent=1 // loop_exit
      _
    %1034 = vsyncpa [#allocation3], 1
    %s1035 = scalar_lea.sflag [#allocation3], 1
    %1036 = vsyncpa %s1035, 1
    %1037 = vsyncpa [#allocation4], 1
    %s1038 = scalar_lea.sflag [#allocation4], 1
    %1039 = vsyncpa %s1038, 1

</llo_original>
